<compile_context>
chip_gen: v5e
topology: v5e:2x2
jax: 0.10.0
libtpu: 0.0.40
codegen_flags: <defaults>
</compile_context>

<pallas_src>
import functools

import jax
import jax.numpy as jnp
from jax.experimental import pallas as pl
from jax.experimental.pallas import tpu as pltpu


def _round_up(x, m):
    return ((x + m - 1) // m) * m


def _emitter_kernel(z_ref, w1_ref, b1_ref, w2_ref, b2_ref,
                    loc_ref, scale_ref, *, hidden_pad, out_pad, input_dim):
    """Fused NormalEmitter forward for one batch tile.

    Stage 1 (one MXU pass): y1 = z @ [w_gh | w_mh | w_loc | w_sc] + b1
    Stage 2 (one MXU pass): y2 = relu(y1[:, :2E]) @ blockdiag(w_gi, w_mi) + b2
    bf16 only on the MXU operands; f32 accumulation and f32 epilogue.
    """
    H, Ip, I = hidden_pad, out_pad, input_dim

    z = z_ref[...]                                        # f32 (bb, z_dim)
    y1 = jnp.dot(z.astype(jnp.bfloat16), w1_ref[...],
                 preferred_element_type=jnp.float32) + b1_ref[...]

    hidden = jnp.maximum(y1[:, :H], 0.0)                  # relu(gate_h)|relu(mean_h)|0-pad
    loc_lin = y1[:, H:H + Ip]                             # z @ w_loc + b_loc (padded cols)
    sc_lin = y1[:, H + Ip:H + 2 * Ip]                     # z @ w_sc  + b_sc  (padded cols)

    y2 = jnp.dot(hidden.astype(jnp.bfloat16), w2_ref[...],
                 preferred_element_type=jnp.float32) + b2_ref[...]
    gate = jax.nn.sigmoid(y2[:, :Ip])                     # EUP (f32)
    mean = y2[:, Ip:2 * Ip]

    loc = (1.0 - gate) * loc_lin + gate * mean
    # Numerically stable softplus: max(x,0) + log1p(exp(-|x|)), all in f32.
    scale = jnp.maximum(sc_lin, 0.0) + jnp.log1p(jnp.exp(-jnp.abs(sc_lin)))

    loc_ref[...] = loc[:, :I]
    scale_ref[...] = scale[:, :I]


def fuse_params(p):
    """One-time weight fusion + bf16 cast (call once, outside the per-step call).

    Column layout of the stage-1 fused weight (every segment padded to a
    multiple of 128 lanes so in-kernel slices stay lane-aligned):
        [ gate_h (E) | mean_h (E) | 0..H | loc (I) 0..Ip | scale (I) 0..Ip ]
    Stage-2 weight is blockdiag(w_gi, w_mi) on the same padded grid.
    Returns (fused_arrays, input_dim).
    """
    E = p["w_gh"].shape[1]
    I = p["w_loc"].shape[1]
    Z = p["w_gh"].shape[0]
    H = _round_up(2 * E, 128)     # hidden segment width
    Ip = _round_up(I, 128)        # each output segment width

    w1 = jnp.zeros((Z, H + 2 * Ip), jnp.float32)
    w1 = w1.at[:, :E].set(p["w_gh"])
    w1 = w1.at[:, E:2 * E].set(p["w_mh"])
    w1 = w1.at[:, H:H + I].set(p["w_loc"])
    w1 = w1.at[:, H + Ip:H + Ip + I].set(p["w_sc"])

    b1 = jnp.zeros((1, H + 2 * Ip), jnp.float32)
    b1 = b1.at[:, :E].set(p["b_gh"])
    b1 = b1.at[:, E:2 * E].set(p["b_mh"])
    b1 = b1.at[:, H:H + I].set(p["b_loc"])
    b1 = b1.at[:, H + Ip:H + Ip + I].set(p["b_sc"])

    w2 = jnp.zeros((H, 2 * Ip), jnp.float32)
    w2 = w2.at[:E, :I].set(p["w_gi"])
    w2 = w2.at[E:2 * E, Ip:Ip + I].set(p["w_mi"])

    b2 = jnp.zeros((1, 2 * Ip), jnp.float32)
    b2 = b2.at[:, :I].set(p["b_gi"])
    b2 = b2.at[:, Ip:Ip + I].set(p["b_mi"])

    fused = dict(w1=w1.astype(jnp.bfloat16), b1=b1,        # bf16 MXU weights
                 w2=w2.astype(jnp.bfloat16), b2=b2)        # biases stay f32
    return fused, I


@functools.partial(jax.jit, static_argnames=("input_dim", "block_b"))
def normal_emitter_forward(z, fused, *, input_dim, block_b=1024):
    """z: (B, z_dim) f32; fused: arrays from fuse_params; input_dim: static int."""
    B, z_dim = z.shape
    H, two_ip = fused["w2"].shape        # static shapes -> Python ints
    Ip = two_ip // 2
    I = input_dim

    # Batch tile: multiple of 8 sublanes. No wrapper-side padding: Pallas handles
    # the ragged last block (only valid rows of the final tile are written back).
    bb = min(block_b, _round_up(B, 8))
    bb = max(8, (bb // 8) * 8)
    # Keep >= 2 grid steps when the batch allows it so both v7x TCs get work.
    if B >= 16 and pl.cdiv(B, bb) == 1:
        bb = max(8, _round_up(pl.cdiv(B, 2), 8))
    nb = pl.cdiv(B, bb)

    kernel = functools.partial(_emitter_kernel,
                               hidden_pad=H, out_pad=Ip, input_dim=I)

    in_specs = [
        pl.BlockSpec((bb, z_dim), lambda i: (i, 0)),
        pl.BlockSpec(fused["w1"].shape, lambda i: (0, 0)),   # VMEM-resident weights
        pl.BlockSpec(fused["b1"].shape, lambda i: (0, 0)),
        pl.BlockSpec(fused["w2"].shape, lambda i: (0, 0)),
        pl.BlockSpec(fused["b2"].shape, lambda i: (0, 0)),
    ]
    out_specs = (
        pl.BlockSpec((bb, I), lambda i: (i, 0)),
        pl.BlockSpec((bb, I), lambda i: (i, 0)),
    )

    # Advisory cost hint — built from Python ints only (fixes the tracer crash).
    flops = int(2 * B * (z_dim * (H + 2 * Ip) + H * 2 * Ip))
    bytes_accessed = int(
        2 * (fused["w1"].size + fused["w2"].size)          # bf16 weights
        + 4 * (fused["b1"].size + fused["b2"].size)        # f32 biases
        + 4 * B * z_dim                                    # f32 z
        + 2 * 4 * B * I)                                   # f32 loc + scale
    cost = pl.CostEstimate(flops=flops,
                           transcendentals=int(3 * B * Ip),
                           bytes_accessed=bytes_accessed)

    loc, scale = pl.pallas_call(
        kernel,
        out_shape=(
            jax.ShapeDtypeStruct((B, I), jnp.float32),
            jax.ShapeDtypeStruct((B, I), jnp.float32),
        ),
        grid=(nb,),
        in_specs=in_specs,
        out_specs=out_specs,
        compiler_params=pltpu.CompilerParams(
            dimension_semantics=("parallel",)),
        cost_estimate=cost,
    )(z, fused["w1"], fused["b1"], fused["w2"], fused["b2"])
    return loc, scale


def init_params(key, input_dim, z_dim, emission_dim):
    """Deterministic synthetic init; weights stored as (in_features, out_features)."""
    def linear(key, fan_in, fan_out):
        kw, kb = jax.random.split(key)
        bound = 1.0 / jnp.sqrt(fan_in)
        w = jax.random.uniform(kw, (fan_in, fan_out), jnp.float32, -bound, bound)
        b = jax.random.uniform(kb, (1, fan_out), jnp.float32, -bound, bound)
        return w, b

    keys = jax.random.split(key, 6)
    w_gh, b_gh = linear(keys[0], z_dim, emission_dim)
    w_gi, b_gi = linear(keys[1], emission_dim, input_dim)
    w_mh, b_mh = linear(keys[2], z_dim, emission_dim)
    w_mi, b_mi = linear(keys[3], emission_dim, input_dim)
    w_loc, b_loc = linear(keys[4], z_dim, input_dim)
    w_sc, b_sc = linear(keys[5], z_dim, input_dim)
    return dict(w_gh=w_gh, b_gh=b_gh, w_gi=w_gi, b_gi=b_gi,
                w_mh=w_mh, b_mh=b_mh, w_mi=w_mi, b_mi=b_mi,
                w_loc=w_loc, b_loc=b_loc, w_sc=w_sc, b_sc=b_sc)


def reference_forward(z, p):
    """Pure-JAX f32 reference (mirrors the PyTorch module)."""
    gate_h = jnp.maximum(z @ p["w_gh"] + p["b_gh"], 0.0)
    gate = jax.nn.sigmoid(gate_h @ p["w_gi"] + p["b_gi"])
    mean_h = jnp.maximum(z @ p["w_mh"] + p["b_mh"], 0.0)
    mean = mean_h @ p["w_mi"] + p["b_mi"]
    loc_lin = z @ p["w_loc"] + p["b_loc"]
    loc = (1.0 - gate) * loc_lin + gate * mean
    scale = jax.nn.softplus(z @ p["w_sc"] + p["b_sc"])
    return loc, scale


if __name__ == "__main__":
    batch, z_dim, emission_dim, input_dim = 8, 32, 64, 128

    key = jax.random.PRNGKey(0)
    kz, kp = jax.random.split(key)
    z = jax.random.normal(kz, (batch, z_dim), jnp.float32)
    params = init_params(kp, input_dim, z_dim, emission_dim)
    fused, in_dim = fuse_params(params)   # one-time weight fusion + bf16 cast

    loc, scale = jax.block_until_ready(
        normal_emitter_forward(z, fused, input_dim=in_dim))

    loc_ref, scale_ref = reference_forward(z, params)
    # bf16 MXU operands (f32 accumulation) -> relaxed tolerance vs f32 reference.
    assert jnp.allclose(loc, loc_ref, atol=2e-2, rtol=2e-2)
    assert jnp.allclose(scale, scale_ref, atol=2e-2, rtol=2e-2)
    assert bool(jnp.all(scale > 0))

    print("KERNEL_OK")
</pallas_src>

<mosaic_0001>
module attributes {stable_mosaic.version = 11 : i64} {
  func.func @_emitter_kernel(%arg0: i32, %arg1: memref<8x32xf32, #tpu.memory_space<vmem>>, %arg2: memref<32x384xbf16, #tpu.memory_space<vmem>>, %arg3: memref<1x384xf32, #tpu.memory_space<vmem>>, %arg4: memref<128x256xbf16, #tpu.memory_space<vmem>>, %arg5: memref<1x256xf32, #tpu.memory_space<vmem>>, %arg6: memref<8x128xf32, #tpu.memory_space<vmem>>, %arg7: memref<8x128xf32, #tpu.memory_space<vmem>>) attributes {dimension_semantics = [#tpu.dimension_semantics<parallel>], iteration_bounds = array<i64: 1>, scalar_prefetch = 0 : i64, scratch_operands = 0 : i64, tpu.core_type = #tpu.core_type<tc>, window_params = [{transform_indices = @transform_0, window_bounds = array<i64: 8, 32>}, {pipeline_mode = #tpu.pipeline_mode<synchronous>, transform_indices = @transform_1, window_bounds = array<i64: 32, 384>}, {pipeline_mode = #tpu.pipeline_mode<synchronous>, transform_indices = @transform_2, window_bounds = array<i64: 1, 384>}, {pipeline_mode = #tpu.pipeline_mode<synchronous>, transform_indices = @transform_3, window_bounds = array<i64: 128, 256>}, {pipeline_mode = #tpu.pipeline_mode<synchronous>, transform_indices = @transform_4, window_bounds = array<i64: 1, 256>}, {transform_indices = @transform_5, window_bounds = array<i64: 8, 128>}, {transform_indices = @transform_6, window_bounds = array<i64: 8, 128>}]} {
    %c0 = arith.constant 0 : index
    %c0_0 = arith.constant 0 : index
    %0 = vector.load %arg1[%c0, %c0_0] : memref<8x32xf32, #tpu.memory_space<vmem>>, vector<8x32xf32>
    %1 = arith.truncf %0 : vector<8x32xf32> to vector<8x32xbf16>
    %c0_1 = arith.constant 0 : index
    %c0_2 = arith.constant 0 : index
    %2 = vector.load %arg2[%c0_1, %c0_2] : memref<32x384xbf16, #tpu.memory_space<vmem>>, vector<32x384xbf16>
    %cst = arith.constant dense<0.000000e+00> : vector<8x384xf32>
    %3 = tpu.matmul %1, %2, %cst {dimension_numbers = #tpu.dot_dimension_numbers<[1], [0], [0], [1], [0, 0, 1, 1], [], []>} : vector<8x32xbf16>, vector<32x384xbf16>, vector<8x384xf32> -> vector<8x384xf32>
    %c0_3 = arith.constant 0 : index
    %c0_4 = arith.constant 0 : index
    %4 = vector.load %arg3[%c0_3, %c0_4] : memref<1x384xf32, #tpu.memory_space<vmem>>, vector<1x384xf32>
    %5 = vector.broadcast %4 : vector<1x384xf32> to vector<8x384xf32>
    %6 = arith.addf %3, %5 : vector<8x384xf32>
    %7 = vector.extract_strided_slice %6 {offsets = [0, 0], sizes = [8, 128], strides = [1, 1]} : vector<8x384xf32> to vector<8x128xf32>
    %cst_5 = arith.constant 0.000000e+00 : f32
    %8 = vector.broadcast %cst_5 : f32 to vector<8x128xf32>
    %9 = arith.maximumf %7, %8 : vector<8x128xf32>
    %10 = vector.extract_strided_slice %6 {offsets = [0, 128], sizes = [8, 128], strides = [1, 1]} : vector<8x384xf32> to vector<8x128xf32>
    %11 = vector.extract_strided_slice %6 {offsets = [0, 256], sizes = [8, 128], strides = [1, 1]} : vector<8x384xf32> to vector<8x128xf32>
    %12 = arith.truncf %9 : vector<8x128xf32> to vector<8x128xbf16>
    %c0_6 = arith.constant 0 : index
    %c0_7 = arith.constant 0 : index
    %13 = vector.load %arg4[%c0_6, %c0_7] : memref<128x256xbf16, #tpu.memory_space<vmem>>, vector<128x256xbf16>
    %cst_8 = arith.constant dense<0.000000e+00> : vector<8x256xf32>
    %14 = tpu.matmul %12, %13, %cst_8 {dimension_numbers = #tpu.dot_dimension_numbers<[1], [0], [0], [1], [0, 0, 1, 1], [], []>} : vector<8x128xbf16>, vector<128x256xbf16>, vector<8x256xf32> -> vector<8x256xf32>
    %c0_9 = arith.constant 0 : index
    %c0_10 = arith.constant 0 : index
    %15 = vector.load %arg5[%c0_9, %c0_10] : memref<1x256xf32, #tpu.memory_space<vmem>>, vector<1x256xf32>
    %16 = vector.broadcast %15 : vector<1x256xf32> to vector<8x256xf32>
    %17 = arith.addf %14, %16 : vector<8x256xf32>
    %18 = vector.extract_strided_slice %17 {offsets = [0, 0], sizes = [8, 128], strides = [1, 1]} : vector<8x256xf32> to vector<8x128xf32>
    %19 = arith.negf %18 : vector<8x128xf32>
    %20 = math.exp %19 : vector<8x128xf32>
    %cst_11 = arith.constant 1.000000e+00 : f32
    %21 = vector.broadcast %cst_11 : f32 to vector<8x128xf32>
    %22 = arith.addf %21, %20 : vector<8x128xf32>
    %23 = arith.divf %21, %22 : vector<8x128xf32>
    %24 = vector.extract_strided_slice %17 {offsets = [0, 128], sizes = [8, 128], strides = [1, 1]} : vector<8x256xf32> to vector<8x128xf32>
    %cst_12 = arith.constant 1.000000e+00 : f32
    %25 = vector.broadcast %cst_12 : f32 to vector<8x128xf32>
    %26 = arith.subf %25, %23 : vector<8x128xf32>
    %27 = arith.mulf %26, %10 : vector<8x128xf32>
    %28 = arith.mulf %23, %24 : vector<8x128xf32>
    %29 = arith.addf %27, %28 : vector<8x128xf32>
    %cst_13 = arith.constant 0.000000e+00 : f32
    %30 = vector.broadcast %cst_13 : f32 to vector<8x128xf32>
    %31 = arith.maximumf %11, %30 : vector<8x128xf32>
    %32 = math.absf %11 : vector<8x128xf32>
    %cst_14 = arith.constant 0.000000e+00 : f32
    %33 = vector.broadcast %cst_14 : f32 to vector<8x128xf32>
    %34 = arith.subf %33, %32 : vector<8x128xf32>
    %35 = math.exp %34 : vector<8x128xf32>
    %36 = math.log1p %35 : vector<8x128xf32>
    %37 = arith.addf %31, %36 : vector<8x128xf32>
    %c0_15 = arith.constant 0 : index
    %c0_16 = arith.constant 0 : index
    %38 = vector.load %arg6[%c0_15, %c0_16] : memref<8x128xf32, #tpu.memory_space<vmem>>, vector<8x128xf32>
    tpu.vector_store %arg6[%c0_15, %c0_16], %29 {strides = array<i32>} : memref<8x128xf32, #tpu.memory_space<vmem>>, vector<8x128xf32>,
    %c0_17 = arith.constant 0 : index
    %c0_18 = arith.constant 0 : index
    %39 = vector.load %arg7[%c0_17, %c0_18] : memref<8x128xf32, #tpu.memory_space<vmem>>, vector<8x128xf32>
    tpu.vector_store %arg7[%c0_17, %c0_18], %37 {strides = array<i32>} : memref<8x128xf32, #tpu.memory_space<vmem>>, vector<8x128xf32>,
    return
  }
  func.func @transform_0(%arg0: i32) -> (i32, i32) {
    %c0_i32 = arith.constant 0 : i32
    %c0_i32_0 = arith.constant 0 : i32
    return %arg0, %c0_i32 : i32, i32
  }
  func.func @transform_1(%arg0: i32) -> (i32, i32) {
    %c0_i32 = arith.constant 0 : i32
    %c0_i32_0 = arith.constant 0 : i32
    %c0_i32_1 = arith.constant 0 : i32
    return %c0_i32, %c0_i32_0 : i32, i32
  }
  func.func @transform_2(%arg0: i32) -> (i32, i32) {
    %c0_i32 = arith.constant 0 : i32
    %c0_i32_0 = arith.constant 0 : i32
    %c0_i32_1 = arith.constant 0 : i32
    return %c0_i32, %c0_i32_0 : i32, i32
  }
  func.func @transform_3(%arg0: i32) -> (i32, i32) {
    %c0_i32 = arith.constant 0 : i32
    %c0_i32_0 = arith.constant 0 : i32
    %c0_i32_1 = arith.constant 0 : i32
    return %c0_i32, %c0_i32_0 : i32, i32
  }
  func.func @transform_4(%arg0: i32) -> (i32, i32) {
    %c0_i32 = arith.constant 0 : i32
    %c0_i32_0 = arith.constant 0 : i32
    %c0_i32_1 = arith.constant 0 : i32
    return %c0_i32, %c0_i32_0 : i32, i32
  }
  func.func @transform_5(%arg0: i32) -> (i32, i32) {
    %c0_i32 = arith.constant 0 : i32
    %c0_i32_0 = arith.constant 0 : i32
    return %arg0, %c0_i32 : i32, i32
  }
  func.func @transform_6(%arg0: i32) -> (i32, i32) {
    %c0_i32 = arith.constant 0 : i32
    %c0_i32_0 = arith.constant 0 : i32
    return %arg0, %c0_i32 : i32, i32
  }
}

</mosaic_0001>

<llo_original>
// kernel: normal_emitter_forward.1
$region0: #{normal_emitter_forward.1}
  #allocation0 [shape = 'u32[]', space=smem, size = 0x4, offset = 0x4, fixed_abs, tag = 'smem constant byte address 0x4 - core index']
  #allocation1 [shape = 'u32[72,128]{1,0:T(1,128)}', space=vmem, size = 0x9000, scoped, tag = 'internal scratch']
  %s0 = inlined_call_operand.hbm [shape: f32[8,32], index: 0, kind: input, shape index: {}]
  %s1 = inlined_call_operand.hbm [shape: bf16[32,384], index: 1, kind: input, shape index: {}]
  %s2 = inlined_call_operand.hbm [shape: f32[1,384], index: 2, kind: input, shape index: {}]
  %s3 = inlined_call_operand.hbm [shape: bf16[128,256], index: 3, kind: input, shape index: {}]
  %s4 = inlined_call_operand.hbm [shape: f32[1,256], index: 4, kind: input, shape index: {}]
  %s5 = inlined_call_operand.hbm [shape: f32[8,128], index: 5, kind: output, shape index: {0}]
  %s6 = inlined_call_operand.hbm [shape: f32[8,128], index: 6, kind: output, shape index: {1}]
  %7 = xla_tuple %s5, %s6
  %s8 = sld [smem:[#allocation0]]
  $region58: #{normal_emitter_forward.1} parent=0
    _
  %s10 = ssub.s32 1, %s8
  %s11 = scalar_select 0, %s10, %s8
  $region1: #{normal_emitter_forward.1} parent=0
    #allocation2 [shape = 'u8[4096]{0}', space=vmem, size = 0x1000, scoped, tag = 'input window, operand 0, single buffered']
    #allocation3 [shape = 's32[1]{0}', space=sflag, size = 0x4, scoped, tag = 'scoped memory for normal_emitter_forward.1']
    #allocation4 [shape = 's32[1]{0}', space=sflag, size = 0x4, scoped, tag = 'scoped memory for normal_emitter_forward.1']
    #allocation5 [shape = 'u8[24576]{0}', space=vmem, size = 0x6000, scoped, tag = 'input window, operand 1, single buffered']
    #allocation6 [shape = 's32[1]{0}', space=sflag, size = 0x4, scoped, tag = 'scoped memory for normal_emitter_forward.1']
    #allocation7 [shape = 'u8[1536]{0}', space=vmem, size = 0x800, scoped, tag = 'input window, operand 2, single buffered']
    #allocation8 [shape = 'u8[65536]{0}', space=vmem, size = 0x10000, scoped, tag = 'input window, operand 3, single buffered']
    #allocation9 [shape = 's32[1]{0}', space=sflag, size = 0x4, scoped, tag = 'scoped memory for normal_emitter_forward.1']
    #allocation10 [shape = 'u8[1024]{0}', space=vmem, size = 0x400, scoped, tag = 'input window, operand 4, single buffered']
    #allocation11 [shape = 'u8[4096]{0}', space=vmem, size = 0x1000, scoped, tag = 'output window, operand 0, single buffered']
    #allocation12 [shape = 'u8[4096]{0}', space=vmem, size = 0x1000, scoped, tag = 'output window, operand 1, single buffered']
    #allocation13 [shape = 's32[1]{0}', space=sflag, size = 0x4, scoped, tag = 'scoped memory for normal_emitter_forward.1']
    %12 = vsyncpa [#allocation3], 0
    %13 = vsyncpa [#allocation6], 0
    %14 = vsyncpa [#allocation9], 0
    %15 = vsyncpa [#allocation4], 0
    %16 = vsyncpa [#allocation13], 0
    // Predicated region
    $region2: #{normal_emitter_forward.1} parent=1 // pred_check
      _
    $region3: #{normal_emitter_forward.1} parent=1 // pred_check_branch
      %18 = sbr.rel (0) target = $region5
    $region4: #{normal_emitter_forward.1} parent=1 // pred_region
      %20 = vsyncadd [#allocation3], 0
      %s22 = sshll.u32 %s0, 4
      %s23 = int_to_ptr.hbm [resolvable:$true] %s22
      %s24 = sshll.u32 [#allocation2], 4
      %s25 = int_to_ptr.vmem [resolvable:$true] %s24
      %27 = dma.hbm_to_vmem [thread:$0]  %s23, 128, %s25, [#allocation3]
    $region5: #{normal_emitter_forward.1} parent=1 // pred_fallthru
      _
    // Predicated region
    $region6: #{normal_emitter_forward.1} parent=1 // pred_check
      _
    $region7: #{normal_emitter_forward.1} parent=1 // pred_check_branch
      %29 = sbr.rel (0) target = $region9
    $region8: #{normal_emitter_forward.1} parent=1 // pred_region
      %31 = vsyncadd [#allocation6], 0
      %s32 = sshll.u32 %s1, 4
      %s33 = int_to_ptr.hbm [resolvable:$true] %s32
      %s34 = sshll.u32 [#allocation5], 4
      %s35 = int_to_ptr.vmem [resolvable:$true] %s34
      %40 = dma.hbm_to_vmem [thread:$0]  %s33, 768, %s35, [#allocation6], 192, 192, 12
    $region9: #{normal_emitter_forward.1} parent=1 // pred_fallthru
      _
    // Predicated region
    $region10: #{normal_emitter_forward.1} parent=1 // pred_check
      _
    $region11: #{normal_emitter_forward.1} parent=1 // pred_check_branch
      %42 = sbr.rel (0) target = $region13
    $region12: #{normal_emitter_forward.1} parent=1 // pred_region
      %44 = vsyncadd [#allocation6], 0
      %s46 = sshll.u32 %s2, 4
      %s47 = int_to_ptr.hbm [resolvable:$true] %s46
      %s48 = sshll.u32 [#allocation7], 4
      %s49 = int_to_ptr.vmem [resolvable:$true] %s48
      %51 = dma.hbm_to_vmem [thread:$0]  %s47, 48, %s49, [#allocation6]
    $region13: #{normal_emitter_forward.1} parent=1 // pred_fallthru
      _
    // Predicated region
    $region14: #{normal_emitter_forward.1} parent=1 // pred_check
      _
    $region15: #{normal_emitter_forward.1} parent=1 // pred_check_branch
      %53 = sbr.rel (0) target = $region17
    $region16: #{normal_emitter_forward.1} parent=1 // pred_region
      %55 = vsyncadd [#allocation9], 0
      %s56 = sshll.u32 %s3, 4
      %s57 = int_to_ptr.hbm [resolvable:$true] %s56
      %s58 = sshll.u32 [#allocation8], 4
      %s59 = int_to_ptr.vmem [resolvable:$true] %s58
      %64 = dma.hbm_to_vmem [thread:$0]  %s57, 2048, %s59, [#allocation9], 128, 128, 8
    $region17: #{normal_emitter_forward.1} parent=1 // pred_fallthru
      _
    // Predicated region
    $region18: #{normal_emitter_forward.1} parent=1 // pred_check
      _
    $region19: #{normal_emitter_forward.1} parent=1 // pred_check_branch
      %66 = sbr.rel (0) target = $region21
    $region20: #{normal_emitter_forward.1} parent=1 // pred_region
      %68 = vsyncadd [#allocation9], 0
      %s70 = sshll.u32 %s4, 4
      %s71 = int_to_ptr.hbm [resolvable:$true] %s70
      %s72 = sshll.u32 [#allocation10], 4
      %s73 = int_to_ptr.vmem [resolvable:$true] %s72
      %75 = dma.hbm_to_vmem [thread:$0]  %s71, 32, %s73, [#allocation9]
    $region21: #{normal_emitter_forward.1} parent=1 // pred_fallthru
      _
    // Predicated region
    $region22: #{normal_emitter_forward.1} parent=1 // pred_check
      _
    $region23: #{normal_emitter_forward.1} parent=1 // pred_check_branch
      %77 = sbr.rel (0) target = $region25
    $region24: #{normal_emitter_forward.1} parent=1 // pred_region
      %79 = dma.done [#allocation3], 128
    $region25: #{normal_emitter_forward.1} parent=1 // pred_fallthru
      _
    // Predicated region
    $region26: #{normal_emitter_forward.1} parent=1 // pred_check
      _
    $region27: #{normal_emitter_forward.1} parent=1 // pred_check_branch
      %81 = sbr.rel (0) target = $region29
    $region28: #{normal_emitter_forward.1} parent=1 // pred_region
      %83 = dma.done [#allocation6], 768
    $region29: #{normal_emitter_forward.1} parent=1 // pred_fallthru
      _
    // Predicated region
    $region30: #{normal_emitter_forward.1} parent=1 // pred_check
      _
    $region31: #{normal_emitter_forward.1} parent=1 // pred_check_branch
      %85 = sbr.rel (0) target = $region33
    $region32: #{normal_emitter_forward.1} parent=1 // pred_region
      %87 = dma.done [#allocation6], 48
    $region33: #{normal_emitter_forward.1} parent=1 // pred_fallthru
      _
    // Predicated region
    $region34: #{normal_emitter_forward.1} parent=1 // pred_check
      _
    $region35: #{normal_emitter_forward.1} parent=1 // pred_check_branch
      %89 = sbr.rel (0) target = $region37
    $region36: #{normal_emitter_forward.1} parent=1 // pred_region
      %91 = dma.done [#allocation9], 2048
    $region37: #{normal_emitter_forward.1} parent=1 // pred_fallthru
      _
    // Predicated region
    $region38: #{normal_emitter_forward.1} parent=1 // pred_check
      _
    $region39: #{normal_emitter_forward.1} parent=1 // pred_check_branch
      %93 = sbr.rel (0) target = $region41
    $region40: #{normal_emitter_forward.1} parent=1 // pred_region
      %95 = dma.done [#allocation9], 32
    $region41: #{normal_emitter_forward.1} parent=1 // pred_fallthru
      _
    %v97 = vld [vmem:[#allocation2] sm:$0xff]
    %v98 = vpack.c.bf16 %v97, %v97
    %v99 = vld [vmem:[#allocation5] sm:$0xff]
    %v100 = vld [vmem:[#allocation5 + $0x8] sm:$0xf]
    %v101 = vld [vmem:[#allocation5 + $0xc] sm:$0xff]
    %v102 = vld [vmem:[#allocation5 + $0x14] sm:$0xf]
    %v103 = vld [vmem:[#allocation5 + $0x18] sm:$0xff]
    %v104 = vld [vmem:[#allocation5 + $0x20] sm:$0xf]
    %v105 = vld [vmem:[#allocation5 + $0x24] sm:$0xff]
    %v106 = vld [vmem:[#allocation5 + $0x2c] sm:$0xf]
    %v107 = vld [vmem:[#allocation7] sm:$0x7]
    %v109 = vperm.slane %v107, 0
    %v110 = vperm.slane %v107, 1
    %v111 = vperm.slane %v107, 2
    %v123 = vunpack.c.l.b16 %v99
    %v124 = vunpack.c.h.b16 %v99
    %v125 = vunpack.c.l.b16 %v100
    %v126 = vunpack.c.l.b16 %v101
    %v127 = vunpack.c.h.b16 %v101
    %v128 = vunpack.c.l.b16 %v102
    %v129 = vunpack.c.l.b16 %v103
    %v130 = vunpack.c.h.b16 %v103
    %v131 = vunpack.c.l.b16 %v104
    %v132 = vunpack.c.l.b16 %v105
    %v133 = vunpack.c.h.b16 %v105
    %v134 = vunpack.c.l.b16 %v106
    %v135 = vpack.c.b16 %v126, %v123
    %v136 = vpack.c.b16 %v127, %v124
    %v137 = vpack.c.b16 %v128, %v125
    %v138 = vpack.c.b16 %v132, %v129
    %v139 = vpack.c.b16 %v133, %v130
    %v140 = vpack.c.b16 %v134, %v131
    %vm147 = vcmask 261120
    %v149 = vsel %vm147, %v98, 0
    %151 = vmatpush.bf16.msra.mxu0 0
    %152 = vmatpush.bf16.msra.mxu0 0
    %153 = vmatpush.bf16.msra.mxu0 0
    %154 = vmatpush.bf16.msra.mxu0 0
    %155 = vmatpush.bf16.msra.mxu0 0
    %156 = vmatpush.bf16.msra.mxu0 0
    %157 = vmatpush.bf16.msra.mxu0 %v138
    %158 = vmatpush.bf16.msra.mxu0 %v135
    %159 = vmatmul.bf16.gmra.mxu0 %v149
    %v160 = vpop.f32.mrf.mxu0
    %v161 = vadd.f32 %v109, %v160
    %v162 = vpop.f32.mrf.mxu0
    %163 = vdwg.mxu0
    %164 = vmatpush.bf16.msra.mxu0 0
    %165 = vmatpush.bf16.msra.mxu0 0
    %166 = vmatpush.bf16.msra.mxu0 0
    %167 = vmatpush.bf16.msra.mxu0 0
    %168 = vmatpush.bf16.msra.mxu0 0
    %169 = vmatpush.bf16.msra.mxu0 0
    %170 = vmatpush.bf16.msra.mxu0 %v139
    %171 = vmatpush.bf16.msra.mxu0 %v136
    %172 = vmatmul.bf16.gmra.mxu0 %v149
    %v173 = vpop.f32.mrf.mxu0
    %v174 = vadd.f32 %v110, %v173
    %v175 = vpop.f32.mrf.mxu0
    %176 = vdwg.mxu0
    %177 = vmatpush.bf16.msra.mxu0 0
    %178 = vmatpush.bf16.msra.mxu0 0
    %179 = vmatpush.bf16.msra.mxu0 0
    %180 = vmatpush.bf16.msra.mxu0 0
    %181 = vmatpush.bf16.msra.mxu0 0
    %182 = vmatpush.bf16.msra.mxu0 0
    %183 = vmatpush.bf16.msra.mxu0 %v140
    %184 = vmatpush.bf16.msra.mxu0 %v137
    %185 = vmatmul.bf16.gmra.mxu0 %v149
    %v186 = vpop.f32.mrf.mxu0
    %v187 = vadd.f32 %v111, %v186
    %v188 = vpop.f32.mrf.mxu0
    %189 = vdwg.mxu0
    %v190 = vmax.f32 %v161, 0.0
    %v191 = vpack.c.bf16 %v190, %v190
    %v192 = vld [vmem:[#allocation8] sm:$0xff]
    %v193 = vld [vmem:[#allocation8 + $0x8] sm:$0xff]
    %v194 = vld [vmem:[#allocation8 + $0x10] sm:$0xff]
    %v195 = vld [vmem:[#allocation8 + $0x18] sm:$0xff]
    %v196 = vld [vmem:[#allocation8 + $0x20] sm:$0xff]
    %v197 = vld [vmem:[#allocation8 + $0x28] sm:$0xff]
    %v198 = vld [vmem:[#allocation8 + $0x30] sm:$0xff]
    %v199 = vld [vmem:[#allocation8 + $0x38] sm:$0xff]
    %v200 = vld [vmem:[#allocation8 + $0x40] sm:$0xff]
    %v201 = vld [vmem:[#allocation8 + $0x48] sm:$0xff]
    %v202 = vld [vmem:[#allocation8 + $0x50] sm:$0xff]
    %v203 = vld [vmem:[#allocation8 + $0x58] sm:$0xff]
    %v204 = vld [vmem:[#allocation8 + $0x60] sm:$0xff]
    %v205 = vld [vmem:[#allocation8 + $0x68] sm:$0xff]
    %v206 = vld [vmem:[#allocation8 + $0x70] sm:$0xff]
    %v207 = vld [vmem:[#allocation8 + $0x78] sm:$0xff]
    %v208 = vld [vmem:[#allocation10] sm:$0x3]
    %v210 = vperm.slane %v208, 0
    %v211 = vperm.slane %v208, 1
    %v230 = vunpack.c.l.b16 %v192
    %v231 = vunpack.c.h.b16 %v192
    %v232 = vunpack.c.l.b16 %v193
    %v233 = vunpack.c.h.b16 %v193
    %v234 = vunpack.c.l.b16 %v194
    %v235 = vunpack.c.h.b16 %v194
    %v236 = vunpack.c.l.b16 %v195
    %v237 = vunpack.c.h.b16 %v195
    %v238 = vunpack.c.l.b16 %v196
    %v239 = vunpack.c.h.b16 %v196
    %v240 = vunpack.c.l.b16 %v197
    %v241 = vunpack.c.h.b16 %v197
    %v242 = vunpack.c.l.b16 %v198
    %v243 = vunpack.c.h.b16 %v198
    %v244 = vunpack.c.l.b16 %v199
    %v245 = vunpack.c.h.b16 %v199
    %v246 = vunpack.c.l.b16 %v200
    %v247 = vunpack.c.h.b16 %v200
    %v248 = vunpack.c.l.b16 %v201
    %v249 = vunpack.c.h.b16 %v201
    %v250 = vunpack.c.l.b16 %v202
    %v251 = vunpack.c.h.b16 %v202
    %v252 = vunpack.c.l.b16 %v203
    %v253 = vunpack.c.h.b16 %v203
    %v254 = vunpack.c.l.b16 %v204
    %v255 = vunpack.c.h.b16 %v204
    %v256 = vunpack.c.l.b16 %v205
    %v257 = vunpack.c.h.b16 %v205
    %v258 = vunpack.c.l.b16 %v206
    %v259 = vunpack.c.h.b16 %v206
    %v260 = vunpack.c.l.b16 %v207
    %v261 = vunpack.c.h.b16 %v207
    %v262 = vpack.c.b16 %v232, %v230
    %v263 = vpack.c.b16 %v233, %v231
    %v264 = vpack.c.b16 %v236, %v234
    %v265 = vpack.c.b16 %v237, %v235
    %v266 = vpack.c.b16 %v240, %v238
    %v267 = vpack.c.b16 %v241, %v239
    %v268 = vpack.c.b16 %v244, %v242
    %v269 = vpack.c.b16 %v245, %v243
    %v270 = vpack.c.b16 %v248, %v246
    %v271 = vpack.c.b16 %v249, %v247
    %v272 = vpack.c.b16 %v252, %v250
    %v273 = vpack.c.b16 %v253, %v251
    %v274 = vpack.c.b16 %v256, %v254
    %v275 = vpack.c.b16 %v257, %v255
    %v276 = vpack.c.b16 %v260, %v258
    %v277 = vpack.c.b16 %v261, %v259
    %294 = vmatpush.bf16.msra.mxu0 %v276
    %295 = vmatpush.bf16.msra.mxu0 %v274
    %296 = vmatpush.bf16.msra.mxu0 %v272
    %297 = vmatpush.bf16.msra.mxu0 %v270
    %298 = vmatpush.bf16.msra.mxu0 %v268
    %299 = vmatpush.bf16.msra.mxu0 %v266
    %300 = vmatpush.bf16.msra.mxu0 %v264
    %301 = vmatpush.bf16.msra.mxu0 %v262
    %302 = vmatmul.bf16.gmra.mxu0 %v191
    %v303 = vpop.f32.mrf.mxu0
    %v304 = vadd.f32 %v210, %v303
    %v305 = vpop.f32.mrf.mxu0
    %306 = vdwg.mxu0
    %307 = vmatpush.bf16.msra.mxu0 %v277
    %308 = vmatpush.bf16.msra.mxu0 %v275
    %309 = vmatpush.bf16.msra.mxu0 %v273
    %310 = vmatpush.bf16.msra.mxu0 %v271
    %311 = vmatpush.bf16.msra.mxu0 %v269
    %312 = vmatpush.bf16.msra.mxu0 %v267
    %313 = vmatpush.bf16.msra.mxu0 %v265
    %314 = vmatpush.bf16.msra.mxu0 %v263
    %315 = vmatmul.bf16.gmra.mxu0 %v191
    %v316 = vpop.f32.mrf.mxu0
    %v317 = vadd.f32 %v211, %v316
    %v318 = vpop.f32.mrf.mxu0
    %319 = vdwg.mxu0
    %v320 = vxor.u32 %v304, 2147483648
    %v321 = vmul.f32 %v320, 1.442695
    %v322 = vpow.pop %v321
    %v323 = vadd.f32 %v322, 1.0
    %v324 = vrcp.pop %v323
    %v325 = vmul.f32 %v323, %v324
    %v326 = vsub.f32 1.0, %v325
    %v327 = vmul.f32 %v324, %v326
    %v328 = vadd.f32 %v324, %v327
    %vm329 = vweird.f32 %v323
    %vm330 = vweird.f32 %v324
    %vm331 = vmor %vm329, %vm330
    %v332 = vsel %vm331, %v324, %v328
    %v333 = vand.u32 2147483647, %v323
    %vm334 = vcmp.eq.f32.partialorder %v333, 8.507059e+37
    %v335 = vand.u32 %v323, 2147483648
    %v336 = vor.u32 1.1754944e-38, %v335
    %v337 = vsel %vm334, %v336, %v332
    %v338 = vmul.f32 1.0, %v337
    %v339 = vsub.f32 1.0, %v338
    %v340 = vmul.f32 %v339, %v174
    %v341 = vmul.f32 %v338, %v317
    %v342 = vadd.f32 %v340, %v341
    %v343 = vmax.f32 %v187, 0.0
    %v344 = vand.u32 2147483647, %v187
    %v345 = vsub.f32 0.0, %v344
    %v346 = vmul.f32 %v345, 1.442695
    %v347 = vpow.pop %v346
    %v348 = vadd.f32 %v347, 1.0
    %v349 = vlog2.pop %v348
    %v350 = vmul.f32 %v349, 0.6931472
    %v351 = vmul.f32 -0.5, %v347
    %v352 = vadd.f32 %v351, 1.0
    %v353 = vmul.f32 %v352, %v347
    %v354 = vand.u32 2147483647, %v347
    %vm355 = vcmp.lt.f32.partialorder %v354, 0.0004427343
    %v356 = vsel %vm355, %v353, %v350
    %v357 = vadd.f32 %v343, %v356
    %358 = vst [vmem:[#allocation11] sm:$0xff] %v342
    %359 = vst [vmem:[#allocation12] sm:$0xff] %v357
    // Predicated region
    $region42: #{normal_emitter_forward.1} parent=1 // pred_check
      _
    $region43: #{normal_emitter_forward.1} parent=1 // pred_check_branch
      %361 = sbr.rel (0) target = $region45
    $region44: #{normal_emitter_forward.1} parent=1 // pred_region
      %363 = vsyncadd [#allocation4], 0
      %s365 = sshll.u32 [#allocation11], 4
      %s366 = int_to_ptr.vmem [resolvable:$true] %s365
      %s367 = sshll.u32 %s5, 4
      %s368 = int_to_ptr.hbm [resolvable:$true] %s367
      %370 = dma.vmem_to_hbm [thread:$0]  %s366, 128, %s368, [#allocation4]
    $region45: #{normal_emitter_forward.1} parent=1 // pred_fallthru
      _
    // Predicated region
    $region46: #{normal_emitter_forward.1} parent=1 // pred_check
      _
    $region47: #{normal_emitter_forward.1} parent=1 // pred_check_branch
      %372 = sbr.rel (0) target = $region49
    $region48: #{normal_emitter_forward.1} parent=1 // pred_region
      %374 = vsyncadd [#allocation13], 0
      %s376 = sshll.u32 [#allocation12], 4
      %s377 = int_to_ptr.vmem [resolvable:$true] %s376
      %s378 = sshll.u32 %s6, 4
      %s379 = int_to_ptr.hbm [resolvable:$true] %s378
      %381 = dma.vmem_to_hbm [thread:$0]  %s377, 128, %s379, [#allocation13]
    $region49: #{normal_emitter_forward.1} parent=1 // pred_fallthru
      _
    // Predicated region
    $region50: #{normal_emitter_forward.1} parent=1 // pred_check
      _
    $region51: #{normal_emitter_forward.1} parent=1 // pred_check_branch
      %383 = sbr.rel (0) target = $region53
    $region52: #{normal_emitter_forward.1} parent=1 // pred_region
      %385 = dma.done [#allocation4], 128
    $region53: #{normal_emitter_forward.1} parent=1 // pred_fallthru
      _
    // Predicated region
    $region54: #{normal_emitter_forward.1} parent=1 // pred_check
      _
    $region55: #{normal_emitter_forward.1} parent=1 // pred_check_branch
      %387 = sbr.rel (0) target = $region57
    $region56: #{normal_emitter_forward.1} parent=1 // pred_region
      %389 = dma.done [#allocation13], 128
    $region57: #{normal_emitter_forward.1} parent=1 // pred_fallthru
      _
    %390 = vsyncpa [#allocation3], 1
    %391 = vsyncpa [#allocation6], 1
    %392 = vsyncpa [#allocation9], 1
    %393 = vsyncpa [#allocation4], 1
    %394 = vsyncpa [#allocation13], 1

</llo_original>
